<compile_context>
chip_gen: v6e
topology: v6e:2x2x1
jax: 0.10.0
libtpu: 0.0.40
codegen_flags: <defaults>
</compile_context>

<pallas_src>
import jax
import jax.numpy as jnp
from jax.experimental import pallas as pl
from jax.experimental.pallas import tpu as pltpu

_LANES = 128                              # vreg lane width: lane-dense last dim
_MAX_BLOCK_BYTES = 6 * 1024 * 1024        # ~6 MiB per block
_VMEM_LIMIT_BYTES = 48 * 1024 * 1024      # explicit scoped-VMEM limit (all gens)


def _round_up(n, m):
    return ((n + m - 1) // m) * m


def _identity_copy_kernel(x_ref, o_ref):
    # Identity: copy the whole VMEM tile to the (aliased) output tile.
    o_ref[...] = x_ref[...]


def dummy_transformer_block(x, *, materialize=True):
    """Pallas implementation of DummyTransformerBlock.forward (identity).

    With materialize=False the input is returned as-is (the optimal identity).
    With materialize=True (default) a Pallas copy produces a fresh buffer,
    staged through VMEM in multi-MiB lane-dense (rows, 128) blocks and aliased
    onto the input HBM buffer so XLA may elide the round-trip when possible.
    """
    if not materialize:
        return x

    orig_shape = x.shape
    total = x.size
    if total == 0:
        return x

    itemsize = jnp.dtype(x.dtype).itemsize
    # Dtype-aware minimum sublane multiple: f32 -> 8, bf16 -> 16, int8/fp8 -> 32.
    sublane = max(8, 32 // itemsize)

    # Lane-dense 2D view: pad the flattened length to a multiple of 128 so the
    # last block dim is always a full 128-lane extent (never (N, 1)).
    flat = x.reshape(-1)
    padded_total = _round_up(total, _LANES)
    if padded_total != total:
        flat = jnp.pad(flat, (0, padded_total - total))
    rows = padded_total // _LANES
    x2d = flat.reshape(rows, _LANES)

    # Block sizing from the VMEM row footprint (lane dim already 128, so the
    # logical bytes equal the padded bytes).  Blocks are evened out so there is
    # no tiny ragged tail and the grid balances across cores.
    row_bytes = _LANES * itemsize
    max_block_rows = max(sublane,
                         (_MAX_BLOCK_BYTES // row_bytes) // sublane * sublane)
    if rows <= max_block_rows:
        block_rows = rows                       # single full-extent block: legal
    else:
        num_blocks = pl.cdiv(rows, max_block_rows)
        block_rows = _round_up(pl.cdiv(rows, num_blocks), sublane)
    grid = (pl.cdiv(rows, block_rows),)

    y2d = pl.pallas_call(
        _identity_copy_kernel,
        out_shape=jax.ShapeDtypeStruct((rows, _LANES), x.dtype),
        grid=grid,
        in_specs=[pl.BlockSpec((block_rows, _LANES), lambda i: (i, 0))],
        out_specs=pl.BlockSpec((block_rows, _LANES), lambda i: (i, 0)),
        # Output aliases the (padded) input HBM buffer: zero extra allocation,
        # and XLA can drop the round-trip when that buffer is otherwise dead.
        input_output_aliases={0: 0},
        # Advisory: pure memory traffic, no compute.
        cost_estimate=pl.CostEstimate(
            flops=0,
            transcendentals=0,
            bytes_accessed=2 * padded_total * itemsize,
        ),
        compiler_params=pltpu.CompilerParams(
            # Single grid axis marked parallel so multi-TC chips (v7x) can
            # shard the copy across TensorCores; near-no-op on 1-TC chips.
            dimension_semantics=("parallel",),
            vmem_limit_bytes=_VMEM_LIMIT_BYTES,
        ),
    )(x2d)

    y_flat = y2d.reshape(-1)
    if padded_total != total:
        y_flat = y_flat[:total]
    return y_flat.reshape(orig_shape)


if __name__ == "__main__":
    # DummyTransformerBlock has no parameters, so there is nothing to
    # initialize — just build a deterministic input.
    key = jax.random.PRNGKey(0)
    batch, seq_len, emb_dim = 2, 8, 32
    x = jax.random.normal(key, (batch, seq_len, emb_dim), dtype=jnp.float32)

    y = dummy_transformer_block(x)
    y = jax.block_until_ready(y)

    # Verify identity semantics exactly (shape, dtype, values).
    assert y.shape == x.shape
    assert y.dtype == x.dtype
    assert bool(jnp.all(y == x))

    # Also exercise a non-multiple-of-128 size to cover the padded path.
    x_odd = jax.random.normal(jax.random.PRNGKey(1), (3, 5, 7), dtype=jnp.float32)
    y_odd = jax.block_until_ready(dummy_transformer_block(x_odd))
    assert y_odd.shape == x_odd.shape
    assert bool(jnp.all(y_odd == x_odd))

    print("KERNEL_OK")
</pallas_src>

<mosaic_0001>
module attributes {stable_mosaic.version = 11 : i64} {
  func.func @_identity_copy_kernel(%arg0: i32, %arg1: memref<4x128xf32, #tpu.memory_space<vmem>>, %arg2: memref<4x128xf32, #tpu.memory_space<vmem>>) attributes {dimension_semantics = [#tpu.dimension_semantics<parallel>], iteration_bounds = array<i64: 1>, scalar_prefetch = 0 : i64, scratch_operands = 0 : i64, tpu.core_type = #tpu.core_type<tc>, window_params = [{transform_indices = @transform_0, window_bounds = array<i64: 4, 128>}, {transform_indices = @transform_1, window_bounds = array<i64: 4, 128>}]} {
    %c0 = arith.constant 0 : index
    %c0_0 = arith.constant 0 : index
    %0 = vector.load %arg1[%c0, %c0_0] : memref<4x128xf32, #tpu.memory_space<vmem>>, vector<4x128xf32>
    %c0_1 = arith.constant 0 : index
    %c0_2 = arith.constant 0 : index
    %1 = vector.load %arg2[%c0_1, %c0_2] : memref<4x128xf32, #tpu.memory_space<vmem>>, vector<4x128xf32>
    tpu.vector_store %arg2[%c0_1, %c0_2], %0 {strides = array<i32>} : memref<4x128xf32, #tpu.memory_space<vmem>>, vector<4x128xf32>,
    return
  }
  func.func @transform_0(%arg0: i32) -> (i32, i32) {
    %c0_i32 = arith.constant 0 : i32
    %c0_i32_0 = arith.constant 0 : i32
    return %arg0, %c0_i32 : i32, i32
  }
  func.func @transform_1(%arg0: i32) -> (i32, i32) {
    %c0_i32 = arith.constant 0 : i32
    %c0_i32_0 = arith.constant 0 : i32
    return %arg0, %c0_i32 : i32, i32
  }
}

</mosaic_0001>

<llo_original>
// kernel: tpu_custom_call.1
$region0: #{tpu_custom_call.1}
  #allocation0 [shape = 'u32[]', space=smem, size = 0x4, offset = 0x4, fixed_abs, tag = 'smem constant byte address 0x4 - core index']
  #allocation1 [shape = 'u32[144,128]{1,0:T(1,128)}', space=vmem, size = 0x12000, scoped, tag = 'internal scratch']
  %s0 = inlined_call_operand.hbm [shape: f32[4,128], index: 0, kind: input, shape index: {}, may-alias: {0,1}]
  %s1 = inlined_call_operand.hbm [shape: f32[4,128], index: 1, kind: output, shape index: {}, may-alias: {0,1}]
  %s2 = sld [smem:[#allocation0]]
  $region18: #{tpu_custom_call.1} parent=0
    _
  %s4 = ssub.s32 1, %s2
  %s5 = scalar_select 0, %s4, %s2
  $region1: #{tpu_custom_call.1} parent=0
    #allocation2 [shape = 'u8[2048]{0}', space=vmem, size = 0x800, scoped, tag = 'input window, operand 0, single buffered']
    #allocation3 [shape = 's32[1]{0}', space=sflag, size = 0x4, scoped, tag = 'scoped memory for tpu_custom_call.1']
    #allocation4 [shape = 's32[1]{0}', space=sflag, size = 0x4, scoped, tag = 'scoped memory for tpu_custom_call.1']
    #allocation5 [shape = 'u8[2048]{0}', space=vmem, size = 0x800, scoped, tag = 'output window, operand 0, single buffered']
    %6 = vsyncpa [#allocation3], 0
    %7 = vsyncpa [#allocation4], 0
    // Predicated region
    $region2: #{tpu_custom_call.1} parent=1 // pred_check
      _
    $region3: #{tpu_custom_call.1} parent=1 // pred_check_branch
      %9 = sbr.rel (0) target = $region5
    $region4: #{tpu_custom_call.1} parent=1 // pred_region
      %s11 = ssub.s32 64, 64
      %12 = vsyncadd [#allocation3], %s11
      %s14 = sshll.u32 [#allocation2], 4
      %s15 = int_to_ptr.vmem [resolvable:$true] %s14
      %17 = dma.hbm_to_vmem [thread:$0]  %s0, 64, %s15, [#allocation3]
    $region5: #{tpu_custom_call.1} parent=1 // pred_fallthru
      _
    // Predicated region
    $region6: #{tpu_custom_call.1} parent=1 // pred_check
      _
    $region7: #{tpu_custom_call.1} parent=1 // pred_check_branch
      %19 = sbr.rel (0) target = $region9
    $region8: #{tpu_custom_call.1} parent=1 // pred_region
      %20 = dma.done [#allocation3], 64
    $region9: #{tpu_custom_call.1} parent=1 // pred_fallthru
      _
    %v21 = vld [vmem:[#allocation2] sm:$0xf]
    %22 = vst [vmem:[#allocation5] sm:$0xf] %v21
    // Predicated region
    $region10: #{tpu_custom_call.1} parent=1 // pred_check
      _
    $region11: #{tpu_custom_call.1} parent=1 // pred_check_branch
      %24 = sbr.rel (0) target = $region13
    $region12: #{tpu_custom_call.1} parent=1 // pred_region
      %s26 = ssub.s32 64, 64
      %27 = vsyncadd [#allocation4], %s26
      %s29 = sshll.u32 [#allocation5], 4
      %s30 = int_to_ptr.vmem [resolvable:$true] %s29
      %32 = dma.vmem_to_hbm [thread:$0]  %s30, 64, %s1, [#allocation4]
    $region13: #{tpu_custom_call.1} parent=1 // pred_fallthru
      _
    // Predicated region
    $region14: #{tpu_custom_call.1} parent=1 // pred_check
      _
    $region15: #{tpu_custom_call.1} parent=1 // pred_check_branch
      %34 = sbr.rel (0) target = $region17
    $region16: #{tpu_custom_call.1} parent=1 // pred_region
      %35 = dma.done [#allocation4], 64
    $region17: #{tpu_custom_call.1} parent=1 // pred_fallthru
      _
    %36 = vsyncpa [#allocation3], 1
    %37 = vsyncpa [#allocation4], 1

</llo_original>
